<compile_context>
chip_gen: v6e
topology: v6e:2x2x1
jax: 0.10.0
libtpu: 0.0.40
codegen_flags: <defaults>
</compile_context>

<pallas_src>
import jax
import jax.numpy as jnp
from jax.experimental import pallas as pl
from jax.experimental.pallas import tpu as pltpu

# ---------------- problem sizes (small, consistent with the module) ----------
N = 2                  # batch
C = 32                 # gate_channels (must be >= reduction_ratio)
H, W = 8, 16           # spatial size
HW = H * W             # flattened spatial (lane dim) = 128
RED = 16               # ChannelGate reduction_ratio
HID = C // RED         # hidden width of the channel-gate MLP (= 2)
KS = 7                 # SpatialGate kernel size
PAD = (KS - 1) // 2    # conv padding = 3
EPS = 1e-5

# SMEM scalar-vector layout: [0:KS) max-channel taps*bn_scale,
# [KS:2KS) mean-channel taps*bn_scale, [2KS] bn_shift, [2KS+1 : 2KS+1+HID) b1.
SC_SHIFT = 2 * KS
SC_B1 = 2 * KS + 1
N_SCALARS = 2 * KS + 1 + HID


def cbam_kernel(x_ref, wp_ref, sc_ref, out_ref):
    """x_ref: [N, C, HW] VMEM.  wp_ref: [C, 2*HID+1] VMEM packed params,
    columns = (w1 cols | w2 rows as C-columns | b2).  sc_ref: [N_SCALARS] SMEM."""
    x = x_ref[...]                                        # [N, C, HW] f32

    # ---------------- ChannelGate (C stays on the sublane axis) ----------------
    avg_p = jnp.mean(x, axis=-1, keepdims=True)           # [N, C, 1] lane reduce
    max_p = jnp.max(x, axis=-1, keepdims=True)            # [N, C, 1]

    b2 = wp_ref[:, 2 * HID:2 * HID + 1][None]             # [1, C, 1]

    def mlp(pooled):                                       # pooled: [N, C, 1]
        # Linear(C, HID) -> ReLU -> Linear(HID, C), no MXU:
        # per hidden unit j: one VPU multiply + one XLU sublane-sum,
        # then a sublane-broadcast FMA against the matching w2 row.
        att = b2
        for j in range(HID):                               # HID = 2, unrolled
            w1j = wp_ref[:, j:j + 1][None]                 # [1, C, 1]
            w2j = wp_ref[:, HID + j:HID + j + 1][None]     # [1, C, 1]
            hj = jnp.sum(pooled * w1j, axis=1, keepdims=True) + sc_ref[SC_B1 + j]
            hj = jnp.maximum(hj, 0.0)                      # ReLU, [N, 1, 1]
            att = att + hj * w2j                           # [N, C, 1]
        return att

    # channel_att_sum = mlp(avg_pool) + mlp(max_pool)  (b2 counted once per pass,
    # exactly as in the PyTorch module).
    ch_scale = jax.nn.sigmoid(mlp(avg_p) + mlp(max_p))     # [N, C, 1] — already
    x_ch = x * ch_scale                                    # lane broadcast, no relayout

    # ---------------- SpatialGate ----------------
    cmax = jnp.max(x_ch, axis=1)                           # [N, HW] ChannelPool max
    cmean = jnp.mean(x_ch, axis=1)                         # [N, HW] ChannelPool mean
    # Zero-padded 7-tap 1-D conv via XLU lane rolls + masked VPU FMAs.
    # pltpu.roll is circular -> mask wrapped lanes back to the conv's zero padding.
    lane = jax.lax.broadcasted_iota(jnp.int32, (N, HW), 1)
    conv = sc_ref[PAD] * cmax + sc_ref[KS + PAD] * cmean   # center tap (shift 0)
    for t in range(KS):                                    # statically unrolled
        s = PAD - t                                        # output j needs input[j - s]
        if s == 0:
            continue
        sm = pltpu.roll(cmax, s % HW, axis=1)              # sm[j] = cmax[(j - s) % HW]
        se = pltpu.roll(cmean, s % HW, axis=1)
        valid = (lane >= s) & (lane < HW + s)              # in-bounds (non-padded) lanes
        conv = conv + jnp.where(valid,
                                sc_ref[t] * sm + sc_ref[KS + t] * se,
                                0.0)
    # BatchNorm2d(1) eval mode: scale folded into the taps; only the shift remains.
    sp_scale = jax.nn.sigmoid(conv + sc_ref[SC_SHIFT])     # [N, HW]
    out_ref[...] = x_ch * sp_scale[:, None, :]             # sublane broadcast


def init_params(key):
    ks = jax.random.split(key, 5)
    nrm = lambda k, shp, s=0.5: (s * jax.random.normal(k, shp)).astype(jnp.float32)
    p = {}
    # ChannelGate MLP: Linear(C, HID) -> ReLU -> Linear(HID, C); stored as
    # w1: [C, HID] (y = x @ w1 + b1), w2: [HID, C].
    p["w1"] = nrm(ks[0], (C, HID))
    p["b1"] = nrm(ks[1], (HID,), 0.1)
    p["w2"] = nrm(ks[2], (HID, C))
    p["b2"] = nrm(ks[3], (C,), 0.1)
    # SpatialGate: Conv2d(2, 1, 7, padding=3, bias=False).  Its input spatial
    # map is (1, HW), so only kernel row kh=PAD touches real rows -> [2, 7].
    p["sconv"] = nrm(ks[4], (1, 2, KS, KS), 0.3)[0, :, PAD, :]        # [2, KS]
    # SpatialGate BatchNorm2d(1), eval mode -> scalar scale / shift.
    s_gamma, s_beta, s_mean, s_var = 1.2, 0.1, 0.05, 0.8
    p["sbn_scale"] = s_gamma / (s_var + EPS) ** 0.5
    p["sbn_shift"] = s_beta - s_mean * p["sbn_scale"]

    # ---- packed kernel operands (one VMEM block + one SMEM scalar vector) ----
    # VMEM, C on sublanes: columns [w1[:,0..HID) | w2[0..HID,:]^T | b2].
    p["w_packed"] = jnp.concatenate(
        [p["w1"], p["w2"].T, p["b2"][:, None]], axis=1)               # [C, 2*HID+1]
    taps = (p["sconv"] * p["sbn_scale"]).reshape(-1)   # BN scale folded into taps
    p["scalars"] = jnp.concatenate(
        [taps,
         jnp.array([p["sbn_shift"]], jnp.float32),
         p["b1"]])                                                    # [N_SCALARS]
    return p


def cbam_forward(x_nchw, p):
    x = x_nchw.astype(jnp.float32).reshape(N, C, HW)
    vmem = pl.BlockSpec(memory_space=pltpu.MemorySpace.VMEM)
    smem = pl.BlockSpec(memory_space=pltpu.MemorySpace.SMEM)
    bytes_accessed = 2 * N * C * HW * 4 + (C * (2 * HID + 1) + N_SCALARS) * 4
    out = pl.pallas_call(
        cbam_kernel,
        out_shape=jax.ShapeDtypeStruct((N, C, HW), jnp.float32),
        in_specs=[vmem, vmem, smem],
        out_specs=vmem,
        # x is dead after the call -> let the output reuse its buffer.
        input_output_aliases={0: 0},
        # Advisory: ~64 KiB moved, essentially no flops -> schedule tightly.
        cost_estimate=pl.CostEstimate(
            flops=12 * N * C * HW,
            transcendentals=N * C + N * HW,
            bytes_accessed=bytes_accessed),
    )(x, p["w_packed"], p["scalars"])
    # CBAM returns the (N, C, 1, H*W)-shaped tensor produced by ChannelGate's view.
    return out.reshape(N, C, 1, HW)


def reference(x_nchw, p):
    """Pure-JAX mirror of the PyTorch CBAM graph (explicit pad/slice conv)."""
    x = x_nchw.astype(jnp.float32).reshape(N, C, 1, HW)   # ChannelGate's x.view(n, c, 1, -1)
    avg_p = x.mean(axis=(2, 3))
    max_p = x.max(axis=(2, 3))
    mlp = lambda v: jnp.maximum(v @ p["w1"] + p["b1"], 0.0) @ p["w2"] + p["b2"]
    ch_scale = jax.nn.sigmoid(mlp(avg_p) + mlp(max_p))
    x_ch = x * ch_scale[:, :, None, None]                 # [N, C, 1, HW]
    comp = jnp.concatenate([x_ch.max(axis=1, keepdims=True),
                            x_ch.mean(axis=1, keepdims=True)], axis=1)[:, :, 0, :]  # [N,2,HW]
    padded = jnp.pad(comp, ((0, 0), (0, 0), (PAD, PAD)))
    conv = jnp.zeros((N, HW), jnp.float32)
    for t in range(KS):
        conv = conv + p["sconv"][0, t] * padded[:, 0, t:t + HW] \
                    + p["sconv"][1, t] * padded[:, 1, t:t + HW]
    sp_scale = jax.nn.sigmoid(conv * p["sbn_scale"] + p["sbn_shift"])
    return x_ch * sp_scale[:, None, None, :]              # [N, C, 1, HW]


if __name__ == "__main__":
    key = jax.random.PRNGKey(0)
    kx, kp = jax.random.split(key)
    x = jax.random.normal(kx, (N, C, H, W), jnp.float32)
    params = init_params(kp)

    out = jax.jit(cbam_forward)(x, params)
    out = jax.block_until_ready(out)
    ref = reference(x, params)

    assert out.shape == (N, C, 1, HW), out.shape
    # All-f32 path: tightened tolerance (was 1e-2) per review.
    err = float(jnp.max(jnp.abs(out - ref)))
    assert jnp.allclose(out, ref, atol=5e-5, rtol=5e-5), err
    print("KERNEL_OK")
</pallas_src>

<mosaic_0001>
module attributes {stable_mosaic.version = 11 : i64} {
  func.func @cbam_kernel(%arg0: memref<2x32x128xf32, #tpu.memory_space<vmem>>, %arg1: memref<32x5xf32, #tpu.memory_space<vmem>>, %arg2: memref<17xf32, #tpu.memory_space<smem>>, %arg3: memref<2x32x128xf32, #tpu.memory_space<vmem>>) attributes {dimension_semantics = [], scalar_prefetch = 0 : i64, scratch_operands = 0 : i64, tpu.core_type = #tpu.core_type<tc>} {
    %c0 = arith.constant 0 : index
    %c0_0 = arith.constant 0 : index
    %c0_1 = arith.constant 0 : index
    %0 = vector.load %arg0[%c0, %c0_0, %c0_1] : memref<2x32x128xf32, #tpu.memory_space<vmem>>, vector<2x32x128xf32>
    %cst = arith.constant dense<0.000000e+00> : vector<2x32xf32>
    %1 = vector.multi_reduction <add>, %0, %cst [2] : vector<2x32x128xf32> to vector<2x32xf32>
    %2 = vector.shape_cast %1 : vector<2x32xf32> to vector<2x32x1xf32>
    %cst_2 = arith.constant 1.280000e+02 : f32
    %3 = vector.broadcast %cst_2 : f32 to vector<2x32x1xf32>
    %4 = arith.divf %2, %3 : vector<2x32x1xf32>
    %cst_3 = arith.constant dense<0xFF800000> : vector<2x32xf32>
    %5 = vector.multi_reduction <maximumf>, %0, %cst_3 [2] : vector<2x32x128xf32> to vector<2x32xf32>
    %6 = vector.shape_cast %5 : vector<2x32xf32> to vector<2x32x1xf32>
    %c0_4 = arith.constant 0 : index
    %c4 = arith.constant 4 : index
    %7 = vector.load %arg1[%c0_4, %c4] : memref<32x5xf32, #tpu.memory_space<vmem>>, vector<32x1xf32>
    %8 = vector.shape_cast %7 : vector<32x1xf32> to vector<1x32x1xf32>
    %c0_5 = arith.constant 0 : index
    %c0_6 = arith.constant 0 : index
    %9 = vector.load %arg1[%c0_5, %c0_6] : memref<32x5xf32, #tpu.memory_space<vmem>>, vector<32x1xf32>
    %10 = vector.shape_cast %9 : vector<32x1xf32> to vector<1x32x1xf32>
    %c0_7 = arith.constant 0 : index
    %c2 = arith.constant 2 : index
    %11 = vector.load %arg1[%c0_7, %c2] : memref<32x5xf32, #tpu.memory_space<vmem>>, vector<32x1xf32>
    %12 = vector.shape_cast %11 : vector<32x1xf32> to vector<1x32x1xf32>
    %13 = vector.broadcast %10 : vector<1x32x1xf32> to vector<2x32x1xf32>
    %14 = arith.mulf %4, %13 : vector<2x32x1xf32>
    %cst_8 = arith.constant dense<0.000000e+00> : vector<2x1xf32>
    %15 = vector.multi_reduction <add>, %14, %cst_8 [1] : vector<2x32x1xf32> to vector<2x1xf32>
    %16 = vector.shape_cast %15 : vector<2x1xf32> to vector<2x1x1xf32>
    %c15 = arith.constant 15 : index
    %17 = memref.load %arg2[%c15] : memref<17xf32, #tpu.memory_space<smem>>
    %18 = vector.broadcast %17 : f32 to vector<2x1x1xf32>
    %19 = arith.addf %16, %18 : vector<2x1x1xf32>
    %cst_9 = arith.constant 0.000000e+00 : f32
    %20 = vector.broadcast %cst_9 : f32 to vector<2x1x1xf32>
    %21 = arith.maximumf %19, %20 : vector<2x1x1xf32>
    %22 = vector.broadcast %21 : vector<2x1x1xf32> to vector<2x32x1xf32>
    %23 = vector.broadcast %12 : vector<1x32x1xf32> to vector<2x32x1xf32>
    %24 = arith.mulf %22, %23 : vector<2x32x1xf32>
    %25 = vector.broadcast %8 : vector<1x32x1xf32> to vector<2x32x1xf32>
    %26 = arith.addf %25, %24 : vector<2x32x1xf32>
    %c0_10 = arith.constant 0 : index
    %c1 = arith.constant 1 : index
    %27 = vector.load %arg1[%c0_10, %c1] : memref<32x5xf32, #tpu.memory_space<vmem>>, vector<32x1xf32>
    %28 = vector.shape_cast %27 : vector<32x1xf32> to vector<1x32x1xf32>
    %c0_11 = arith.constant 0 : index
    %c3 = arith.constant 3 : index
    %29 = vector.load %arg1[%c0_11, %c3] : memref<32x5xf32, #tpu.memory_space<vmem>>, vector<32x1xf32>
    %30 = vector.shape_cast %29 : vector<32x1xf32> to vector<1x32x1xf32>
    %31 = vector.broadcast %28 : vector<1x32x1xf32> to vector<2x32x1xf32>
    %32 = arith.mulf %4, %31 : vector<2x32x1xf32>
    %cst_12 = arith.constant dense<0.000000e+00> : vector<2x1xf32>
    %33 = vector.multi_reduction <add>, %32, %cst_12 [1] : vector<2x32x1xf32> to vector<2x1xf32>
    %34 = vector.shape_cast %33 : vector<2x1xf32> to vector<2x1x1xf32>
    %c16 = arith.constant 16 : index
    %35 = memref.load %arg2[%c16] : memref<17xf32, #tpu.memory_space<smem>>
    %36 = vector.broadcast %35 : f32 to vector<2x1x1xf32>
    %37 = arith.addf %34, %36 : vector<2x1x1xf32>
    %cst_13 = arith.constant 0.000000e+00 : f32
    %38 = vector.broadcast %cst_13 : f32 to vector<2x1x1xf32>
    %39 = arith.maximumf %37, %38 : vector<2x1x1xf32>
    %40 = vector.broadcast %39 : vector<2x1x1xf32> to vector<2x32x1xf32>
    %41 = vector.broadcast %30 : vector<1x32x1xf32> to vector<2x32x1xf32>
    %42 = arith.mulf %40, %41 : vector<2x32x1xf32>
    %43 = arith.addf %26, %42 : vector<2x32x1xf32>
    %c0_14 = arith.constant 0 : index
    %c0_15 = arith.constant 0 : index
    %44 = vector.load %arg1[%c0_14, %c0_15] : memref<32x5xf32, #tpu.memory_space<vmem>>, vector<32x1xf32>
    %45 = vector.shape_cast %44 : vector<32x1xf32> to vector<1x32x1xf32>
    %c0_16 = arith.constant 0 : index
    %c2_17 = arith.constant 2 : index
    %46 = vector.load %arg1[%c0_16, %c2_17] : memref<32x5xf32, #tpu.memory_space<vmem>>, vector<32x1xf32>
    %47 = vector.shape_cast %46 : vector<32x1xf32> to vector<1x32x1xf32>
    %48 = vector.broadcast %45 : vector<1x32x1xf32> to vector<2x32x1xf32>
    %49 = arith.mulf %6, %48 : vector<2x32x1xf32>
    %cst_18 = arith.constant dense<0.000000e+00> : vector<2x1xf32>
    %50 = vector.multi_reduction <add>, %49, %cst_18 [1] : vector<2x32x1xf32> to vector<2x1xf32>
    %51 = vector.shape_cast %50 : vector<2x1xf32> to vector<2x1x1xf32>
    %c15_19 = arith.constant 15 : index
    %52 = memref.load %arg2[%c15_19] : memref<17xf32, #tpu.memory_space<smem>>
    %53 = vector.broadcast %52 : f32 to vector<2x1x1xf32>
    %54 = arith.addf %51, %53 : vector<2x1x1xf32>
    %cst_20 = arith.constant 0.000000e+00 : f32
    %55 = vector.broadcast %cst_20 : f32 to vector<2x1x1xf32>
    %56 = arith.maximumf %54, %55 : vector<2x1x1xf32>
    %57 = vector.broadcast %56 : vector<2x1x1xf32> to vector<2x32x1xf32>
    %58 = vector.broadcast %47 : vector<1x32x1xf32> to vector<2x32x1xf32>
    %59 = arith.mulf %57, %58 : vector<2x32x1xf32>
    %60 = vector.broadcast %8 : vector<1x32x1xf32> to vector<2x32x1xf32>
    %61 = arith.addf %60, %59 : vector<2x32x1xf32>
    %c0_21 = arith.constant 0 : index
    %c1_22 = arith.constant 1 : index
    %62 = vector.load %arg1[%c0_21, %c1_22] : memref<32x5xf32, #tpu.memory_space<vmem>>, vector<32x1xf32>
    %63 = vector.shape_cast %62 : vector<32x1xf32> to vector<1x32x1xf32>
    %c0_23 = arith.constant 0 : index
    %c3_24 = arith.constant 3 : index
    %64 = vector.load %arg1[%c0_23, %c3_24] : memref<32x5xf32, #tpu.memory_space<vmem>>, vector<32x1xf32>
    %65 = vector.shape_cast %64 : vector<32x1xf32> to vector<1x32x1xf32>
    %66 = vector.broadcast %63 : vector<1x32x1xf32> to vector<2x32x1xf32>
    %67 = arith.mulf %6, %66 : vector<2x32x1xf32>
    %cst_25 = arith.constant dense<0.000000e+00> : vector<2x1xf32>
    %68 = vector.multi_reduction <add>, %67, %cst_25 [1] : vector<2x32x1xf32> to vector<2x1xf32>
    %69 = vector.shape_cast %68 : vector<2x1xf32> to vector<2x1x1xf32>
    %c16_26 = arith.constant 16 : index
    %70 = memref.load %arg2[%c16_26] : memref<17xf32, #tpu.memory_space<smem>>
    %71 = vector.broadcast %70 : f32 to vector<2x1x1xf32>
    %72 = arith.addf %69, %71 : vector<2x1x1xf32>
    %cst_27 = arith.constant 0.000000e+00 : f32
    %73 = vector.broadcast %cst_27 : f32 to vector<2x1x1xf32>
    %74 = arith.maximumf %72, %73 : vector<2x1x1xf32>
    %75 = vector.broadcast %74 : vector<2x1x1xf32> to vector<2x32x1xf32>
    %76 = vector.broadcast %65 : vector<1x32x1xf32> to vector<2x32x1xf32>
    %77 = arith.mulf %75, %76 : vector<2x32x1xf32>
    %78 = arith.addf %61, %77 : vector<2x32x1xf32>
    %79 = arith.addf %43, %78 : vector<2x32x1xf32>
    %80 = arith.negf %79 : vector<2x32x1xf32>
    %81 = math.exp %80 : vector<2x32x1xf32>
    %cst_28 = arith.constant 1.000000e+00 : f32
    %82 = vector.broadcast %cst_28 : f32 to vector<2x32x1xf32>
    %83 = arith.addf %82, %81 : vector<2x32x1xf32>
    %84 = arith.divf %82, %83 : vector<2x32x1xf32>
    %85 = vector.broadcast %84 : vector<2x32x1xf32> to vector<2x32x128xf32>
    %86 = arith.mulf %0, %85 : vector<2x32x128xf32>
    %cst_29 = arith.constant dense<0xFF800000> : vector<2x128xf32>
    %87 = vector.multi_reduction <maximumf>, %86, %cst_29 [1] : vector<2x32x128xf32> to vector<2x128xf32>
    %cst_30 = arith.constant dense<0.000000e+00> : vector<2x128xf32>
    %88 = vector.multi_reduction <add>, %86, %cst_30 [1] : vector<2x32x128xf32> to vector<2x128xf32>
    %cst_31 = arith.constant 3.200000e+01 : f32
    %89 = vector.broadcast %cst_31 : f32 to vector<2x128xf32>
    %90 = arith.divf %88, %89 : vector<2x128xf32>
    %91 = tpu.iota {dimensions = array<i32: 1>} : vector<2x128xi32>
    %c3_32 = arith.constant 3 : index
    %92 = memref.load %arg2[%c3_32] : memref<17xf32, #tpu.memory_space<smem>>
    %93 = vector.broadcast %92 : f32 to vector<2x128xf32>
    %94 = arith.mulf %93, %87 : vector<2x128xf32>
    %c10 = arith.constant 10 : index
    %95 = memref.load %arg2[%c10] : memref<17xf32, #tpu.memory_space<smem>>
    %96 = vector.broadcast %95 : f32 to vector<2x128xf32>
    %97 = arith.mulf %96, %90 : vector<2x128xf32>
    %98 = arith.addf %94, %97 : vector<2x128xf32>
    %c3_i32 = arith.constant 3 : i32
    %99 = tpu.dynamic_rotate %87 by %c3_i32 dim 1 : vector<2x128xf32>, i32 -> vector<2x128xf32>
    %c3_i32_33 = arith.constant 3 : i32
    %100 = tpu.dynamic_rotate %90 by %c3_i32_33 dim 1 : vector<2x128xf32>, i32 -> vector<2x128xf32>
    %c3_i32_34 = arith.constant 3 : i32
    %101 = vector.broadcast %c3_i32_34 : i32 to vector<2x128xi32>
    %102 = arith.cmpi sge, %91, %101 : vector<2x128xi32>
    %c131_i32 = arith.constant 131 : i32
    %103 = vector.broadcast %c131_i32 : i32 to vector<2x128xi32>
    %104 = arith.cmpi slt, %91, %103 : vector<2x128xi32>
    %105 = arith.andi %102, %104 : vector<2x128xi1>
    %c0_35 = arith.constant 0 : index
    %106 = memref.load %arg2[%c0_35] : memref<17xf32, #tpu.memory_space<smem>>
    %107 = vector.broadcast %106 : f32 to vector<2x128xf32>
    %108 = arith.mulf %107, %99 : vector<2x128xf32>
    %c7 = arith.constant 7 : index
    %109 = memref.load %arg2[%c7] : memref<17xf32, #tpu.memory_space<smem>>
    %110 = vector.broadcast %109 : f32 to vector<2x128xf32>
    %111 = arith.mulf %110, %100 : vector<2x128xf32>
    %112 = arith.addf %108, %111 : vector<2x128xf32>
    %cst_36 = arith.constant 0.000000e+00 : f32
    %113 = vector.broadcast %cst_36 : f32 to vector<2x128xf32>
    %114 = arith.select %105, %112, %113 : vector<2x128xi1>, vector<2x128xf32>
    %115 = arith.addf %98, %114 : vector<2x128xf32>
    %c2_i32 = arith.constant 2 : i32
    %116 = tpu.dynamic_rotate %87 by %c2_i32 dim 1 : vector<2x128xf32>, i32 -> vector<2x128xf32>
    %c2_i32_37 = arith.constant 2 : i32
    %117 = tpu.dynamic_rotate %90 by %c2_i32_37 dim 1 : vector<2x128xf32>, i32 -> vector<2x128xf32>
    %c2_i32_38 = arith.constant 2 : i32
    %118 = vector.broadcast %c2_i32_38 : i32 to vector<2x128xi32>
    %119 = arith.cmpi sge, %91, %118 : vector<2x128xi32>
    %c130_i32 = arith.constant 130 : i32
    %120 = vector.broadcast %c130_i32 : i32 to vector<2x128xi32>
    %121 = arith.cmpi slt, %91, %120 : vector<2x128xi32>
    %122 = arith.andi %119, %121 : vector<2x128xi1>
    %c1_39 = arith.constant 1 : index
    %123 = memref.load %arg2[%c1_39] : memref<17xf32, #tpu.memory_space<smem>>
    %124 = vector.broadcast %123 : f32 to vector<2x128xf32>
    %125 = arith.mulf %124, %116 : vector<2x128xf32>
    %c8 = arith.constant 8 : index
    %126 = memref.load %arg2[%c8] : memref<17xf32, #tpu.memory_space<smem>>
    %127 = vector.broadcast %126 : f32 to vector<2x128xf32>
    %128 = arith.mulf %127, %117 : vector<2x128xf32>
    %129 = arith.addf %125, %128 : vector<2x128xf32>
    %cst_40 = arith.constant 0.000000e+00 : f32
    %130 = vector.broadcast %cst_40 : f32 to vector<2x128xf32>
    %131 = arith.select %122, %129, %130 : vector<2x128xi1>, vector<2x128xf32>
    %132 = arith.addf %115, %131 : vector<2x128xf32>
    %c1_i32 = arith.constant 1 : i32
    %133 = tpu.dynamic_rotate %87 by %c1_i32 dim 1 : vector<2x128xf32>, i32 -> vector<2x128xf32>
    %c1_i32_41 = arith.constant 1 : i32
    %134 = tpu.dynamic_rotate %90 by %c1_i32_41 dim 1 : vector<2x128xf32>, i32 -> vector<2x128xf32>
    %c1_i32_42 = arith.constant 1 : i32
    %135 = vector.broadcast %c1_i32_42 : i32 to vector<2x128xi32>
    %136 = arith.cmpi sge, %91, %135 : vector<2x128xi32>
    %c129_i32 = arith.constant 129 : i32
    %137 = vector.broadcast %c129_i32 : i32 to vector<2x128xi32>
    %138 = arith.cmpi slt, %91, %137 : vector<2x128xi32>
    %139 = arith.andi %136, %138 : vector<2x128xi1>
    %c2_43 = arith.constant 2 : index
    %140 = memref.load %arg2[%c2_43] : memref<17xf32, #tpu.memory_space<smem>>
    %141 = vector.broadcast %140 : f32 to vector<2x128xf32>
    %142 = arith.mulf %141, %133 : vector<2x128xf32>
    %c9 = arith.constant 9 : index
    %143 = memref.load %arg2[%c9] : memref<17xf32, #tpu.memory_space<smem>>
    %144 = vector.broadcast %143 : f32 to vector<2x128xf32>
    %145 = arith.mulf %144, %134 : vector<2x128xf32>
    %146 = arith.addf %142, %145 : vector<2x128xf32>
    %cst_44 = arith.constant 0.000000e+00 : f32
    %147 = vector.broadcast %cst_44 : f32 to vector<2x128xf32>
    %148 = arith.select %139, %146, %147 : vector<2x128xi1>, vector<2x128xf32>
    %149 = arith.addf %132, %148 : vector<2x128xf32>
    %c127_i32 = arith.constant 127 : i32
    %150 = tpu.dynamic_rotate %87 by %c127_i32 dim 1 : vector<2x128xf32>, i32 -> vector<2x128xf32>
    %c127_i32_45 = arith.constant 127 : i32
    %151 = tpu.dynamic_rotate %90 by %c127_i32_45 dim 1 : vector<2x128xf32>, i32 -> vector<2x128xf32>
    %c-1_i32 = arith.constant -1 : i32
    %152 = vector.broadcast %c-1_i32 : i32 to vector<2x128xi32>
    %153 = arith.cmpi sge, %91, %152 : vector<2x128xi32>
    %c127_i32_46 = arith.constant 127 : i32
    %154 = vector.broadcast %c127_i32_46 : i32 to vector<2x128xi32>
    %155 = arith.cmpi slt, %91, %154 : vector<2x128xi32>
    %156 = arith.andi %153, %155 : vector<2x128xi1>
    %c4_47 = arith.constant 4 : index
    %157 = memref.load %arg2[%c4_47] : memref<17xf32, #tpu.memory_space<smem>>
    %158 = vector.broadcast %157 : f32 to vector<2x128xf32>
    %159 = arith.mulf %158, %150 : vector<2x128xf32>
    %c11 = arith.constant 11 : index
    %160 = memref.load %arg2[%c11] : memref<17xf32, #tpu.memory_space<smem>>
    %161 = vector.broadcast %160 : f32 to vector<2x128xf32>
    %162 = arith.mulf %161, %151 : vector<2x128xf32>
    %163 = arith.addf %159, %162 : vector<2x128xf32>
    %cst_48 = arith.constant 0.000000e+00 : f32
    %164 = vector.broadcast %cst_48 : f32 to vector<2x128xf32>
    %165 = arith.select %156, %163, %164 : vector<2x128xi1>, vector<2x128xf32>
    %166 = arith.addf %149, %165 : vector<2x128xf32>
    %c126_i32 = arith.constant 126 : i32
    %167 = tpu.dynamic_rotate %87 by %c126_i32 dim 1 : vector<2x128xf32>, i32 -> vector<2x128xf32>
    %c126_i32_49 = arith.constant 126 : i32
    %168 = tpu.dynamic_rotate %90 by %c126_i32_49 dim 1 : vector<2x128xf32>, i32 -> vector<2x128xf32>
    %c-2_i32 = arith.constant -2 : i32
    %169 = vector.broadcast %c-2_i32 : i32 to vector<2x128xi32>
    %170 = arith.cmpi sge, %91, %169 : vector<2x128xi32>
    %c126_i32_50 = arith.constant 126 : i32
    %171 = vector.broadcast %c126_i32_50 : i32 to vector<2x128xi32>
    %172 = arith.cmpi slt, %91, %171 : vector<2x128xi32>
    %173 = arith.andi %170, %172 : vector<2x128xi1>
    %c5 = arith.constant 5 : index
    %174 = memref.load %arg2[%c5] : memref<17xf32, #tpu.memory_space<smem>>
    %175 = vector.broadcast %174 : f32 to vector<2x128xf32>
    %176 = arith.mulf %175, %167 : vector<2x128xf32>
    %c12 = arith.constant 12 : index
    %177 = memref.load %arg2[%c12] : memref<17xf32, #tpu.memory_space<smem>>
    %178 = vector.broadcast %177 : f32 to vector<2x128xf32>
    %179 = arith.mulf %178, %168 : vector<2x128xf32>
    %180 = arith.addf %176, %179 : vector<2x128xf32>
    %cst_51 = arith.constant 0.000000e+00 : f32
    %181 = vector.broadcast %cst_51 : f32 to vector<2x128xf32>
    %182 = arith.select %173, %180, %181 : vector<2x128xi1>, vector<2x128xf32>
    %183 = arith.addf %166, %182 : vector<2x128xf32>
    %c125_i32 = arith.constant 125 : i32
    %184 = tpu.dynamic_rotate %87 by %c125_i32 dim 1 : vector<2x128xf32>, i32 -> vector<2x128xf32>
    %c125_i32_52 = arith.constant 125 : i32
    %185 = tpu.dynamic_rotate %90 by %c125_i32_52 dim 1 : vector<2x128xf32>, i32 -> vector<2x128xf32>
    %c-3_i32 = arith.constant -3 : i32
    %186 = vector.broadcast %c-3_i32 : i32 to vector<2x128xi32>
    %187 = arith.cmpi sge, %91, %186 : vector<2x128xi32>
    %c125_i32_53 = arith.constant 125 : i32
    %188 = vector.broadcast %c125_i32_53 : i32 to vector<2x128xi32>
    %189 = arith.cmpi slt, %91, %188 : vector<2x128xi32>
    %190 = arith.andi %187, %189 : vector<2x128xi1>
    %c6 = arith.constant 6 : index
    %191 = memref.load %arg2[%c6] : memref<17xf32, #tpu.memory_space<smem>>
    %192 = vector.broadcast %191 : f32 to vector<2x128xf32>
    %193 = arith.mulf %192, %184 : vector<2x128xf32>
    %c13 = arith.constant 13 : index
    %194 = memref.load %arg2[%c13] : memref<17xf32, #tpu.memory_space<smem>>
    %195 = vector.broadcast %194 : f32 to vector<2x128xf32>
    %196 = arith.mulf %195, %185 : vector<2x128xf32>
    %197 = arith.addf %193, %196 : vector<2x128xf32>
    %cst_54 = arith.constant 0.000000e+00 : f32
    %198 = vector.broadcast %cst_54 : f32 to vector<2x128xf32>
    %199 = arith.select %190, %197, %198 : vector<2x128xi1>, vector<2x128xf32>
    %200 = arith.addf %183, %199 : vector<2x128xf32>
    %c14 = arith.constant 14 : index
    %201 = memref.load %arg2[%c14] : memref<17xf32, #tpu.memory_space<smem>>
    %202 = vector.broadcast %201 : f32 to vector<2x128xf32>
    %203 = arith.addf %200, %202 : vector<2x128xf32>
    %204 = arith.negf %203 : vector<2x128xf32>
    %205 = math.exp %204 : vector<2x128xf32>
    %cst_55 = arith.constant 1.000000e+00 : f32
    %206 = vector.broadcast %cst_55 : f32 to vector<2x128xf32>
    %207 = arith.addf %206, %205 : vector<2x128xf32>
    %208 = arith.divf %206, %207 : vector<2x128xf32>
    %209 = vector.shape_cast %208 : vector<2x128xf32> to vector<2x1x128xf32>
    %210 = vector.broadcast %209 : vector<2x1x128xf32> to vector<2x32x128xf32>
    %211 = arith.mulf %86, %210 : vector<2x32x128xf32>
    %c0_56 = arith.constant 0 : index
    %c0_57 = arith.constant 0 : index
    %c0_58 = arith.constant 0 : index
    %212 = vector.load %arg3[%c0_56, %c0_57, %c0_58] : memref<2x32x128xf32, #tpu.memory_space<vmem>>, vector<2x32x128xf32>
    tpu.vector_store %arg3[%c0_56, %c0_57, %c0_58], %211 {strides = array<i32>} : memref<2x32x128xf32, #tpu.memory_space<vmem>>, vector<2x32x128xf32>,
    return
  }
}

</mosaic_0001>

<llo_original>
// kernel: cbam_forward.1
$region0: #{cbam_forward.1}
  #allocation0 [shape = 'u32[]', space=smem, size = 0x4, offset = 0x4, fixed_abs, tag = 'smem constant byte address 0x4 - core index']
  #allocation1 [shape = 'u32[144,128]{1,0:T(1,128)}', space=vmem, size = 0x12000, scoped, tag = 'internal scratch']
  %s0 = inlined_call_operand.vmem [shape: f32[2,32,128], index: 0, kind: input, shape index: {}, may-alias: {0,3}]
  %s1 = inlined_call_operand.vmem [shape: f32[32,5], index: 1, kind: input, shape index: {}]
  %s2 = inlined_call_operand.vmem [shape: f32[17], index: 2, kind: input, shape index: {}]
  %s3 = inlined_call_operand.vmem [shape: f32[2,32,128], index: 3, kind: output, shape index: {}, may-alias: {0,3}]
  %s4 = sld [smem:[#allocation0]]
  $region26: #{cbam_forward.1} parent=0
    _
  %s6 = ssub.s32 1, %s4
  %s7 = scalar_select 0, %s6, %s4
  $region1: #{cbam_forward.1} parent=0
    #allocation2 [shape = 'u8[512]{0}', space=smem, size = 0x200, scoped, tag = 'input window, operand 2, single buffered']
    #allocation3 [shape = 's32[1]{0}', space=sflag, size = 0x4, scoped, tag = 'scoped memory for cbam_forward.1']
    %8 = vsyncpa [#allocation3], 0
    // Predicated region
    $region2: #{cbam_forward.1} parent=1 // pred_check
      _
    $region3: #{cbam_forward.1} parent=1 // pred_check_branch
      %10 = sbr.rel (0) target = $region5
    $region4: #{cbam_forward.1} parent=1 // pred_region
      _
    $region5: #{cbam_forward.1} parent=1 // pred_fallthru
      _
    // Predicated region
    $region6: #{cbam_forward.1} parent=1 // pred_check
      _
    $region7: #{cbam_forward.1} parent=1 // pred_check_branch
      %12 = sbr.rel (0) target = $region9
    $region8: #{cbam_forward.1} parent=1 // pred_region
      _
    $region9: #{cbam_forward.1} parent=1 // pred_fallthru
      _
    // Predicated region
    $region10: #{cbam_forward.1} parent=1 // pred_check
      _
    $region11: #{cbam_forward.1} parent=1 // pred_check_branch
      %14 = sbr.rel (0) target = $region13
    $region12: #{cbam_forward.1} parent=1 // pred_region
      %s16 = ssub.s32 16, 16
      %17 = vsyncadd [#allocation3], %s16
      %s19 = sshll.u32 %s2, 4
      %s20 = int_to_ptr.vmem [resolvable:$true] %s19
      %22 = dma.vmem_to_smem %s20, 16, [#allocation2], [#allocation3]
    $region13: #{cbam_forward.1} parent=1 // pred_fallthru
      _
    // Predicated region
    $region14: #{cbam_forward.1} parent=1 // pred_check
      _
    $region15: #{cbam_forward.1} parent=1 // pred_check_branch
      %24 = sbr.rel (0) target = $region17
    $region16: #{cbam_forward.1} parent=1 // pred_region
      %25 = dma.done [#allocation3], 16
    $region17: #{cbam_forward.1} parent=1 // pred_fallthru
      _
    %26 = sfence
    %v27 = vld [vmem:[%s0] sm:$0xff]
    %v28 = vld [vmem:[%s0 + $0x8] sm:$0xff]
    %v29 = vld [vmem:[%s0 + $0x10] sm:$0xff]
    %v30 = vld [vmem:[%s0 + $0x18] sm:$0xff]
    %v31 = vld [vmem:[%s0 + $0x20] sm:$0xff]
    %v32 = vld [vmem:[%s0 + $0x28] sm:$0xff]
    %v33 = vld [vmem:[%s0 + $0x30] sm:$0xff]
    %v34 = vld [vmem:[%s0 + $0x38] sm:$0xff]
    %35 = vadd.xlane.f32.xlu0 %v27
    %v36 = vpop.xlane.xlu0 %35
    %37 = vadd.xlane.f32.xlu0 %v28
    %v38 = vpop.xlane.xlu0 %37
    %39 = vadd.xlane.f32.xlu0 %v29
    %v40 = vpop.xlane.xlu0 %39
    %41 = vadd.xlane.f32.xlu0 %v30
    %v42 = vpop.xlane.xlu0 %41
    %43 = vadd.xlane.f32.xlu0 %v31
    %v44 = vpop.xlane.xlu0 %43
    %45 = vadd.xlane.f32.xlu0 %v32
    %v46 = vpop.xlane.xlu0 %45
    %47 = vadd.xlane.f32.xlu0 %v33
    %v48 = vpop.xlane.xlu0 %47
    %49 = vadd.xlane.f32.xlu0 %v34
    %v50 = vpop.xlane.xlu0 %49
    %v51 = vrcp.pop 128.0
    %v52 = vmul.f32 %v36, %v51
    %v53 = vmul.f32 %v38, %v51
    %v54 = vmul.f32 %v40, %v51
    %v55 = vmul.f32 %v42, %v51
    %v56 = vmul.f32 %v44, %v51
    %v57 = vmul.f32 %v46, %v51
    %v58 = vmul.f32 %v48, %v51
    %v59 = vmul.f32 %v50, %v51
    %60 = vmax.xlane.f32.xlu0 %v27
    %v61 = vpop.xlane.xlu0 %60
    %62 = vmax.xlane.f32.xlu0 %v28
    %v63 = vpop.xlane.xlu0 %62
    %64 = vmax.xlane.f32.xlu0 %v29
    %v65 = vpop.xlane.xlu0 %64
    %66 = vmax.xlane.f32.xlu0 %v30
    %v67 = vpop.xlane.xlu0 %66
    %68 = vmax.xlane.f32.xlu0 %v31
    %v69 = vpop.xlane.xlu0 %68
    %70 = vmax.xlane.f32.xlu0 %v32
    %v71 = vpop.xlane.xlu0 %70
    %72 = vmax.xlane.f32.xlu0 %v33
    %v73 = vpop.xlane.xlu0 %72
    %74 = vmax.xlane.f32.xlu0 %v34
    %v75 = vpop.xlane.xlu0 %74
    %v76 = vld [vmem:[%s1] sm:$0xff]
    %v77 = vld [vmem:[%s1 + $0x8] sm:$0xff]
    %v78 = vld [vmem:[%s1 + $0x10] sm:$0xff]
    %v79 = vld [vmem:[%s1 + $0x18] sm:$0xff]
    %v80 = vmul.f32 %v52, %v76
    %v81 = vmul.f32 %v53, %v77
    %v82 = vmul.f32 %v54, %v78
    %v83 = vmul.f32 %v55, %v79
    %v84 = vmul.f32 %v56, %v76
    %v85 = vmul.f32 %v57, %v77
    %v86 = vmul.f32 %v58, %v78
    %v87 = vmul.f32 %v59, %v79
    %vm88 = vcmask 7168
    %v89 = vsel %vm88, %v80, 0.0
    %v90 = vsel %vm88, %v81, 0.0
    %v91 = vadd.f32 %v89, %v90
    %v92 = vsel %vm88, %v82, 0.0
    %v93 = vadd.f32 %v91, %v92
    %v94 = vsel %vm88, %v83, 0.0
    %v95 = vadd.f32 %v93, %v94
    %v96 = vrot.slane %v95, 4
    %v97 = vadd.f32 %v95, %v96
    %v98 = vrot.slane %v97, 2
    %v99 = vadd.f32 %v97, %v98
    %v100 = vrot.slane %v99, 1
    %v101 = vadd.f32 %v99, %v100
    %v102 = vsel %vm88, %v84, 0.0
    %v103 = vsel %vm88, %v85, 0.0
    %v104 = vadd.f32 %v102, %v103
    %v105 = vsel %vm88, %v86, 0.0
    %v106 = vadd.f32 %v104, %v105
    %v107 = vsel %vm88, %v87, 0.0
    %v108 = vadd.f32 %v106, %v107
    %v109 = vrot.slane %v108, 4
    %v110 = vadd.f32 %v108, %v109
    %v111 = vrot.slane %v110, 2
    %v112 = vadd.f32 %v110, %v111
    %v113 = vrot.slane %v112, 1
    %v114 = vadd.f32 %v112, %v113
    %s115 = sld [smem:[#allocation2 + $0xf]]
    %v116 = vstv %s115
    %v117 = vadd.f32 %v101, %v116
    %v118 = vadd.f32 %v114, %v116
    %v119 = vmax.f32 %v117, 0.0
    %v120 = vmax.f32 %v118, 0.0
    %125 = vrot.lane.b32.xlu0 %v76, 126
    %v126 = vpop.permute.xlu0 %125
    %127 = vrot.lane.b32.xlu0 %v77, 126
    %v128 = vpop.permute.xlu0 %127
    %129 = vrot.lane.b32.xlu0 %v78, 126
    %v130 = vpop.permute.xlu0 %129
    %131 = vrot.lane.b32.xlu0 %v79, 126
    %v132 = vpop.permute.xlu0 %131
    %v137 = vmul.f32 %v119, %v126
    %v138 = vmul.f32 %v119, %v128
    %v139 = vmul.f32 %v119, %v130
    %v140 = vmul.f32 %v119, %v132
    %v141 = vmul.f32 %v120, %v126
    %v142 = vmul.f32 %v120, %v128
    %v143 = vmul.f32 %v120, %v130
    %v144 = vmul.f32 %v120, %v132
    %153 = vrot.lane.b32.xlu0 %v137, 4
    %v154 = vpop.permute.xlu0 %153
    %155 = vrot.lane.b32.xlu0 %v138, 4
    %v156 = vpop.permute.xlu0 %155
    %157 = vrot.lane.b32.xlu0 %v139, 4
    %v158 = vpop.permute.xlu0 %157
    %159 = vrot.lane.b32.xlu0 %v140, 4
    %v160 = vpop.permute.xlu0 %159
    %161 = vrot.lane.b32.xlu0 %v141, 4
    %v162 = vpop.permute.xlu0 %161
    %163 = vrot.lane.b32.xlu0 %v142, 4
    %v164 = vpop.permute.xlu0 %163
    %165 = vrot.lane.b32.xlu0 %v143, 4
    %v166 = vpop.permute.xlu0 %165
    %167 = vrot.lane.b32.xlu0 %v144, 4
    %v168 = vpop.permute.xlu0 %167
    %v177 = vadd.f32 %v76, %v154
    %v178 = vadd.f32 %v77, %v156
    %v179 = vadd.f32 %v78, %v158
    %v180 = vadd.f32 %v79, %v160
    %v181 = vadd.f32 %v76, %v162
    %v182 = vadd.f32 %v77, %v164
    %v183 = vadd.f32 %v78, %v166
    %v184 = vadd.f32 %v79, %v168
    %vm185 = vcmask 15368
    %v186 = vsel %vm185, %v80, 0.0
    %v187 = vsel %vm185, %v81, 0.0
    %v188 = vadd.f32 %v186, %v187
    %v189 = vsel %vm185, %v82, 0.0
    %v190 = vadd.f32 %v188, %v189
    %v191 = vsel %vm185, %v83, 0.0
    %v192 = vadd.f32 %v190, %v191
    %v193 = vrot.slane %v192, 4
    %v194 = vadd.f32 %v192, %v193
    %v195 = vrot.slane %v194, 2
    %v196 = vadd.f32 %v194, %v195
    %v197 = vrot.slane %v196, 1
    %v198 = vadd.f32 %v196, %v197
    %v199 = vsel %vm185, %v84, 0.0
    %v200 = vsel %vm185, %v85, 0.0
    %v201 = vadd.f32 %v199, %v200
    %v202 = vsel %vm185, %v86, 0.0
    %v203 = vadd.f32 %v201, %v202
    %v204 = vsel %vm185, %v87, 0.0
    %v205 = vadd.f32 %v203, %v204
    %v206 = vrot.slane %v205, 4
    %v207 = vadd.f32 %v205, %v206
    %v208 = vrot.slane %v207, 2
    %v209 = vadd.f32 %v207, %v208
    %v210 = vrot.slane %v209, 1
    %v211 = vadd.f32 %v209, %v210
    %s212 = sld [smem:[#allocation2 + $0x10]]
    %v213 = vstv %s212
    %v214 = vadd.f32 %v198, %v213
    %v215 = vadd.f32 %v211, %v213
    %v216 = vmax.f32 %v214, 0.0
    %v217 = vmax.f32 %v215, 0.0
    %v218 = vmul.f32 %v216, %v126
    %v219 = vmul.f32 %v216, %v128
    %v220 = vmul.f32 %v216, %v130
    %v221 = vmul.f32 %v216, %v132
    %v222 = vmul.f32 %v217, %v126
    %v223 = vmul.f32 %v217, %v128
    %v224 = vmul.f32 %v217, %v130
    %v225 = vmul.f32 %v217, %v132
    %234 = vrot.lane.b32.xlu0 %v218, 3
    %v235 = vpop.permute.xlu0 %234
    %236 = vrot.lane.b32.xlu0 %v219, 3
    %v237 = vpop.permute.xlu0 %236
    %238 = vrot.lane.b32.xlu0 %v220, 3
    %v239 = vpop.permute.xlu0 %238
    %240 = vrot.lane.b32.xlu0 %v221, 3
    %v241 = vpop.permute.xlu0 %240
    %242 = vrot.lane.b32.xlu0 %v222, 3
    %v243 = vpop.permute.xlu0 %242
    %244 = vrot.lane.b32.xlu0 %v223, 3
    %v245 = vpop.permute.xlu0 %244
    %246 = vrot.lane.b32.xlu0 %v224, 3
    %v247 = vpop.permute.xlu0 %246
    %248 = vrot.lane.b32.xlu0 %v225, 3
    %v249 = vpop.permute.xlu0 %248
    %v258 = vadd.f32 %v177, %v235
    %v259 = vadd.f32 %v178, %v237
    %v260 = vadd.f32 %v179, %v239
    %v261 = vadd.f32 %v180, %v241
    %v262 = vadd.f32 %v181, %v243
    %v263 = vadd.f32 %v182, %v245
    %v264 = vadd.f32 %v183, %v247
    %v265 = vadd.f32 %v184, %v249
    %v266 = vmul.f32 %v61, %v76
    %v267 = vmul.f32 %v63, %v77
    %v268 = vmul.f32 %v65, %v78
    %v269 = vmul.f32 %v67, %v79
    %v270 = vmul.f32 %v69, %v76
    %v271 = vmul.f32 %v71, %v77
    %v272 = vmul.f32 %v73, %v78
    %v273 = vmul.f32 %v75, %v79
    %v274 = vsel %vm88, %v266, 0.0
    %v275 = vsel %vm88, %v267, 0.0
    %v276 = vadd.f32 %v274, %v275
    %v277 = vsel %vm88, %v268, 0.0
    %v278 = vadd.f32 %v276, %v277
    %v279 = vsel %vm88, %v269, 0.0
    %v280 = vadd.f32 %v278, %v279
    %v281 = vrot.slane %v280, 4
    %v282 = vadd.f32 %v280, %v281
    %v283 = vrot.slane %v282, 2
    %v284 = vadd.f32 %v282, %v283
    %v285 = vrot.slane %v284, 1
    %v286 = vadd.f32 %v284, %v285
    %v287 = vsel %vm88, %v270, 0.0
    %v288 = vsel %vm88, %v271, 0.0
    %v289 = vadd.f32 %v287, %v288
    %v290 = vsel %vm88, %v272, 0.0
    %v291 = vadd.f32 %v289, %v290
    %v292 = vsel %vm88, %v273, 0.0
    %v293 = vadd.f32 %v291, %v292
    %v294 = vrot.slane %v293, 4
    %v295 = vadd.f32 %v293, %v294
    %v296 = vrot.slane %v295, 2
    %v297 = vadd.f32 %v295, %v296
    %v298 = vrot.slane %v297, 1
    %v299 = vadd.f32 %v297, %v298
    %v300 = vadd.f32 %v286, %v116
    %v301 = vadd.f32 %v299, %v116
    %v302 = vmax.f32 %v300, 0.0
    %v303 = vmax.f32 %v301, 0.0
    %v304 = vmul.f32 %v302, %v126
    %v305 = vmul.f32 %v302, %v128
    %v306 = vmul.f32 %v302, %v130
    %v307 = vmul.f32 %v302, %v132
    %v308 = vmul.f32 %v303, %v126
    %v309 = vmul.f32 %v303, %v128
    %v310 = vmul.f32 %v303, %v130
    %v311 = vmul.f32 %v303, %v132
    %320 = vrot.lane.b32.xlu0 %v304, 4
    %v321 = vpop.permute.xlu0 %320
    %322 = vrot.lane.b32.xlu0 %v305, 4
    %v323 = vpop.permute.xlu0 %322
    %324 = vrot.lane.b32.xlu0 %v306, 4
    %v325 = vpop.permute.xlu0 %324
    %326 = vrot.lane.b32.xlu0 %v307, 4
    %v327 = vpop.permute.xlu0 %326
    %328 = vrot.lane.b32.xlu0 %v308, 4
    %v329 = vpop.permute.xlu0 %328
    %330 = vrot.lane.b32.xlu0 %v309, 4
    %v331 = vpop.permute.xlu0 %330
    %332 = vrot.lane.b32.xlu0 %v310, 4
    %v333 = vpop.permute.xlu0 %332
    %334 = vrot.lane.b32.xlu0 %v311, 4
    %v335 = vpop.permute.xlu0 %334
    %v344 = vadd.f32 %v76, %v321
    %v345 = vadd.f32 %v77, %v323
    %v346 = vadd.f32 %v78, %v325
    %v347 = vadd.f32 %v79, %v327
    %v348 = vadd.f32 %v76, %v329
    %v349 = vadd.f32 %v77, %v331
    %v350 = vadd.f32 %v78, %v333
    %v351 = vadd.f32 %v79, %v335
    %v352 = vsel %vm185, %v266, 0.0
    %v353 = vsel %vm185, %v267, 0.0
    %v354 = vadd.f32 %v352, %v353
    %v355 = vsel %vm185, %v268, 0.0
    %v356 = vadd.f32 %v354, %v355
    %v357 = vsel %vm185, %v269, 0.0
    %v358 = vadd.f32 %v356, %v357
    %v359 = vrot.slane %v358, 4
    %v360 = vadd.f32 %v358, %v359
    %v361 = vrot.slane %v360, 2
    %v362 = vadd.f32 %v360, %v361
    %v363 = vrot.slane %v362, 1
    %v364 = vadd.f32 %v362, %v363
    %v365 = vsel %vm185, %v270, 0.0
    %v366 = vsel %vm185, %v271, 0.0
    %v367 = vadd.f32 %v365, %v366
    %v368 = vsel %vm185, %v272, 0.0
    %v369 = vadd.f32 %v367, %v368
    %v370 = vsel %vm185, %v273, 0.0
    %v371 = vadd.f32 %v369, %v370
    %v372 = vrot.slane %v371, 4
    %v373 = vadd.f32 %v371, %v372
    %v374 = vrot.slane %v373, 2
    %v375 = vadd.f32 %v373, %v374
    %v376 = vrot.slane %v375, 1
    %v377 = vadd.f32 %v375, %v376
    %v378 = vadd.f32 %v364, %v213
    %v379 = vadd.f32 %v377, %v213
    %v380 = vmax.f32 %v378, 0.0
    %v381 = vmax.f32 %v379, 0.0
    %v382 = vmul.f32 %v380, %v126
    %v383 = vmul.f32 %v380, %v128
    %v384 = vmul.f32 %v380, %v130
    %v385 = vmul.f32 %v380, %v132
    %v386 = vmul.f32 %v381, %v126
    %v387 = vmul.f32 %v381, %v128
    %v388 = vmul.f32 %v381, %v130
    %v389 = vmul.f32 %v381, %v132
    %398 = vrot.lane.b32.xlu0 %v382, 3
    %v399 = vpop.permute.xlu0 %398
    %400 = vrot.lane.b32.xlu0 %v383, 3
    %v401 = vpop.permute.xlu0 %400
    %402 = vrot.lane.b32.xlu0 %v384, 3
    %v403 = vpop.permute.xlu0 %402
    %404 = vrot.lane.b32.xlu0 %v385, 3
    %v405 = vpop.permute.xlu0 %404
    %406 = vrot.lane.b32.xlu0 %v386, 3
    %v407 = vpop.permute.xlu0 %406
    %408 = vrot.lane.b32.xlu0 %v387, 3
    %v409 = vpop.permute.xlu0 %408
    %410 = vrot.lane.b32.xlu0 %v388, 3
    %v411 = vpop.permute.xlu0 %410
    %412 = vrot.lane.b32.xlu0 %v389, 3
    %v413 = vpop.permute.xlu0 %412
    %v422 = vadd.f32 %v344, %v399
    %v423 = vadd.f32 %v345, %v401
    %v424 = vadd.f32 %v346, %v403
    %v425 = vadd.f32 %v347, %v405
    %v426 = vadd.f32 %v348, %v407
    %v427 = vadd.f32 %v349, %v409
    %v428 = vadd.f32 %v350, %v411
    %v429 = vadd.f32 %v351, %v413
    %v430 = vadd.f32 %v258, %v422
    %v431 = vadd.f32 %v259, %v423
    %v432 = vadd.f32 %v260, %v424
    %v433 = vadd.f32 %v261, %v425
    %v434 = vadd.f32 %v262, %v426
    %v435 = vadd.f32 %v263, %v427
    %v436 = vadd.f32 %v264, %v428
    %v437 = vadd.f32 %v265, %v429
    %v438 = vxor.u32 %v430, 2147483648
    %v439 = vxor.u32 %v431, 2147483648
    %v440 = vxor.u32 %v432, 2147483648
    %v441 = vxor.u32 %v433, 2147483648
    %v442 = vxor.u32 %v434, 2147483648
    %v443 = vxor.u32 %v435, 2147483648
    %v444 = vxor.u32 %v436, 2147483648
    %v445 = vxor.u32 %v437, 2147483648
    %v446 = vmul.f32 %v438, 1.442695
    %v447 = vpow.pop %v446
    %v448 = vmul.f32 %v439, 1.442695
    %v449 = vpow.pop %v448
    %v450 = vmul.f32 %v440, 1.442695
    %v451 = vpow.pop %v450
    %v452 = vmul.f32 %v441, 1.442695
    %v453 = vpow.pop %v452
    %v454 = vmul.f32 %v442, 1.442695
    %v455 = vpow.pop %v454
    %v456 = vmul.f32 %v443, 1.442695
    %v457 = vpow.pop %v456
    %v458 = vmul.f32 %v444, 1.442695
    %v459 = vpow.pop %v458
    %v460 = vmul.f32 %v445, 1.442695
    %v461 = vpow.pop %v460
    %v462 = vadd.f32 %v447, 1.0
    %v463 = vadd.f32 %v449, 1.0
    %v464 = vadd.f32 %v451, 1.0
    %v465 = vadd.f32 %v453, 1.0
    %v466 = vadd.f32 %v455, 1.0
    %v467 = vadd.f32 %v457, 1.0
    %v468 = vadd.f32 %v459, 1.0
    %v469 = vadd.f32 %v461, 1.0
    %v470 = vrcp.pop %v462
    %v471 = vmul.f32 1.0, %v470
    %v472 = vrcp.pop %v463
    %v473 = vmul.f32 1.0, %v472
    %v474 = vrcp.pop %v464
    %v475 = vmul.f32 1.0, %v474
    %v476 = vrcp.pop %v465
    %v477 = vmul.f32 1.0, %v476
    %v478 = vrcp.pop %v466
    %v479 = vmul.f32 1.0, %v478
    %v480 = vrcp.pop %v467
    %v481 = vmul.f32 1.0, %v480
    %v482 = vrcp.pop %v468
    %v483 = vmul.f32 1.0, %v482
    %v484 = vrcp.pop %v469
    %v485 = vmul.f32 1.0, %v484
    %487 = vset.pattern.permute.xlu0 4
    %488 = vperm.xlu0 %487, %v471
    %v489 = vpop.permute.xlu0 %488
    %492 = vset.pattern.permute.xlu0 4
    %493 = vperm.xlu0 %492, %v473
    %v494 = vpop.permute.xlu0 %493
    %497 = vset.pattern.permute.xlu0 4
    %498 = vperm.xlu0 %497, %v475
    %v499 = vpop.permute.xlu0 %498
    %502 = vset.pattern.permute.xlu0 4
    %503 = vperm.xlu0 %502, %v477
    %v504 = vpop.permute.xlu0 %503
    %507 = vset.pattern.permute.xlu0 4
    %508 = vperm.xlu0 %507, %v479
    %v509 = vpop.permute.xlu0 %508
    %512 = vset.pattern.permute.xlu0 4
    %513 = vperm.xlu0 %512, %v481
    %v514 = vpop.permute.xlu0 %513
    %517 = vset.pattern.permute.xlu0 4
    %518 = vperm.xlu0 %517, %v483
    %v519 = vpop.permute.xlu0 %518
    %522 = vset.pattern.permute.xlu0 4
    %523 = vperm.xlu0 %522, %v485
    %v524 = vpop.permute.xlu0 %523
    %v526 = vmul.f32 %v27, %v489
    %v527 = vmul.f32 %v28, %v494
    %v528 = vmul.f32 %v29, %v499
    %v529 = vmul.f32 %v30, %v504
    %v530 = vmul.f32 %v31, %v509
    %v531 = vmul.f32 %v32, %v514
    %v532 = vmul.f32 %v33, %v519
    %v533 = vmul.f32 %v34, %v524
    %v534 = vmax.f32 %v526, %v528
    %v535 = vmax.f32 %v527, %v529
    %v536 = vmax.f32 %v534, %v535
    %v537 = vrot.slane %v536, 4
    %v538 = vmax.f32 %v536, %v537
    %v539 = vrot.slane %v538, 2
    %v540 = vmax.f32 %v538, %v539
    %v541 = vrot.slane %v540, 1
    %v542 = vmax.f32 %v540, %v541
    %v543 = vmax.f32 %v530, %v532
    %v544 = vmax.f32 %v531, %v533
    %v545 = vmax.f32 %v543, %v544
    %v546 = vrot.slane %v545, 4
    %v547 = vmax.f32 %v545, %v546
    %v548 = vrot.slane %v547, 2
    %v549 = vmax.f32 %v547, %v548
    %v550 = vrot.slane %v549, 1
    %v551 = vmax.f32 %v549, %v550
    %v552 = vadd.f32 %v526, %v527
    %v553 = vadd.f32 %v552, %v528
    %v554 = vadd.f32 %v553, %v529
    %v555 = vrot.slane %v554, 4
    %v556 = vadd.f32 %v554, %v555
    %v557 = vrot.slane %v556, 2
    %v558 = vadd.f32 %v556, %v557
    %v559 = vrot.slane %v558, 1
    %v560 = vadd.f32 %v558, %v559
    %v561 = vadd.f32 %v530, %v531
    %v562 = vadd.f32 %v561, %v532
    %v563 = vadd.f32 %v562, %v533
    %v564 = vrot.slane %v563, 4
    %v565 = vadd.f32 %v563, %v564
    %v566 = vrot.slane %v565, 2
    %v567 = vadd.f32 %v565, %v566
    %v568 = vrot.slane %v567, 1
    %v569 = vadd.f32 %v567, %v568
    %v570 = vrcp.pop 32.0
    %v571 = vmul.f32 %v560, %v570
    %v572 = vmul.f32 %v569, %v570
    %v573 = vlaneseq
    %v574 = vand.u32 %v573, 127
    %s575 = sld [smem:[#allocation2 + $0x3]]
    %v576 = vstv %s575
    %v577 = vmul.f32 %v576, %v542
    %v578 = vmul.f32 %v576, %v551
    %s579 = sld [smem:[#allocation2 + $0xa]]
    %v580 = vstv %s579
    %v581 = vmul.f32 %v580, %v571
    %v582 = vmul.f32 %v580, %v572
    %v583 = vadd.f32 %v577, %v581
    %v584 = vadd.f32 %v578, %v582
    %vm587 = vcmask 1041409
    %v588 = vsel %vm587, %v551, %v542
    %590 = vrot.lane.b32.xlu0 %v588, 3
    %v591 = vpop.permute.xlu0 %590
    %v594 = vsel %vm587, %v572, %v571
    %596 = vrot.lane.b32.xlu0 %v594, 3
    %v597 = vpop.permute.xlu0 %596
    %vm598 = vcmp.ge.s32.totalorder %v574, 3
    %vm599 = vcmp.lt.s32.totalorder %v574, 131
    %vm600 = vmand %vm598, %vm599
    %s601 = sld [smem:[#allocation2]]
    %v602 = vstv %s601
    %v603 = vmul.f32 %v602, %v591
    %s604 = sld [smem:[#allocation2 + $0x7]]
    %v605 = vstv %s604
    %v606 = vmul.f32 %v605, %v597
    %v607 = vadd.f32 %v603, %v606
    %v608 = vsel %vm600, %v607, 0.0
    %v610 = vrot.slane %v608, 1
    %v613 = vadd.f32 %v583, %v608
    %v614 = vadd.f32 %v584, %v610
    %615 = vrot.lane.b32.xlu0 %v588, 2
    %v616 = vpop.permute.xlu0 %615
    %617 = vrot.lane.b32.xlu0 %v594, 2
    %v618 = vpop.permute.xlu0 %617
    %vm619 = vcmp.ge.s32.totalorder %v574, 2
    %vm620 = vcmp.lt.s32.totalorder %v574, 130
    %vm621 = vmand %vm619, %vm620
    %s622 = sld [smem:[#allocation2 + $0x1]]
    %v623 = vstv %s622
    %v624 = vmul.f32 %v623, %v616
    %s625 = sld [smem:[#allocation2 + $0x8]]
    %v626 = vstv %s625
    %v627 = vmul.f32 %v626, %v618
    %v628 = vadd.f32 %v624, %v627
    %v629 = vsel %vm621, %v628, 0.0
    %v631 = vrot.slane %v629, 1
    %v634 = vadd.f32 %v613, %v629
    %v635 = vadd.f32 %v614, %v631
    %636 = vrot.lane.b32.xlu0 %v588, 1
    %v637 = vpop.permute.xlu0 %636
    %638 = vrot.lane.b32.xlu0 %v594, 1
    %v639 = vpop.permute.xlu0 %638
    %vm640 = vcmp.ge.s32.totalorder %v574, 1
    %vm641 = vcmp.lt.s32.totalorder %v574, 129
    %vm642 = vmand %vm640, %vm641
    %s643 = sld [smem:[#allocation2 + $0x2]]
    %v644 = vstv %s643
    %v645 = vmul.f32 %v644, %v637
    %s646 = sld [smem:[#allocation2 + $0x9]]
    %v647 = vstv %s646
    %v648 = vmul.f32 %v647, %v639
    %v649 = vadd.f32 %v645, %v648
    %v650 = vsel %vm642, %v649, 0.0
    %v652 = vrot.slane %v650, 1
    %v655 = vadd.f32 %v634, %v650
    %v656 = vadd.f32 %v635, %v652
    %657 = vrot.lane.b32.xlu0 %v588, 127
    %v658 = vpop.permute.xlu0 %657
    %659 = vrot.lane.b32.xlu0 %v594, 127
    %v660 = vpop.permute.xlu0 %659
    %vm661 = vcmp.ge.s32.totalorder %v574, 4294967295
    %vm662 = vcmp.lt.s32.totalorder %v574, 127
    %vm663 = vmand %vm661, %vm662
    %s664 = sld [smem:[#allocation2 + $0x4]]
    %v665 = vstv %s664
    %v666 = vmul.f32 %v665, %v658
    %s667 = sld [smem:[#allocation2 + $0xb]]
    %v668 = vstv %s667
    %v669 = vmul.f32 %v668, %v660
    %v670 = vadd.f32 %v666, %v669
    %v671 = vsel %vm663, %v670, 0.0
    %v673 = vrot.slane %v671, 1
    %v676 = vadd.f32 %v655, %v671
    %v677 = vadd.f32 %v656, %v673
    %678 = vrot.lane.b32.xlu0 %v588, 126
    %v679 = vpop.permute.xlu0 %678
    %680 = vrot.lane.b32.xlu0 %v594, 126
    %v681 = vpop.permute.xlu0 %680
    %vm682 = vcmp.ge.s32.totalorder %v574, 4294967294
    %vm683 = vcmp.lt.s32.totalorder %v574, 126
    %vm684 = vmand %vm682, %vm683
    %s685 = sld [smem:[#allocation2 + $0x5]]
    %v686 = vstv %s685
    %v687 = vmul.f32 %v686, %v679
    %s688 = sld [smem:[#allocation2 + $0xc]]
    %v689 = vstv %s688
    %v690 = vmul.f32 %v689, %v681
    %v691 = vadd.f32 %v687, %v690
    %v692 = vsel %vm684, %v691, 0.0
    %v694 = vrot.slane %v692, 1
    %v697 = vadd.f32 %v676, %v692
    %v698 = vadd.f32 %v677, %v694
    %699 = vrot.lane.b32.xlu0 %v588, 125
    %v700 = vpop.permute.xlu0 %699
    %701 = vrot.lane.b32.xlu0 %v594, 125
    %v702 = vpop.permute.xlu0 %701
    %vm703 = vcmp.ge.s32.totalorder %v574, 4294967293
    %vm704 = vcmp.lt.s32.totalorder %v574, 125
    %vm705 = vmand %vm703, %vm704
    %s706 = sld [smem:[#allocation2 + $0x6]]
    %v707 = vstv %s706
    %v708 = vmul.f32 %v707, %v700
    %s709 = sld [smem:[#allocation2 + $0xd]]
    %v710 = vstv %s709
    %v711 = vmul.f32 %v710, %v702
    %v712 = vadd.f32 %v708, %v711
    %v713 = vsel %vm705, %v712, 0.0
    %v715 = vrot.slane %v713, 1
    %v718 = vadd.f32 %v697, %v713
    %v719 = vadd.f32 %v698, %v715
    %s720 = sld [smem:[#allocation2 + $0xe]]
    %v721 = vstv %s720
    %v722 = vadd.f32 %v718, %v721
    %v723 = vadd.f32 %v719, %v721
    %v724 = vxor.u32 %v722, 2147483648
    %v725 = vxor.u32 %v723, 2147483648
    %v726 = vmul.f32 %v724, 1.442695
    %v727 = vpow.pop %v726
    %v728 = vmul.f32 %v725, 1.442695
    %v729 = vpow.pop %v728
    %v730 = vadd.f32 %v727, 1.0
    %v731 = vadd.f32 %v729, 1.0
    %v732 = vrcp.pop %v730
    %v733 = vmul.f32 1.0, %v732
    %v734 = vrcp.pop %v731
    %v735 = vmul.f32 1.0, %v734
    %v736 = vlaneseq
    %v737 = vshrl.u32 %v736, 7
    %v738 = vsub.s32 0, %v737
    %v739 = vrot.slane %v733, %v738
    %v740 = vlaneseq
    %v741 = vshrl.u32 %v740, 7
    %v742 = vsub.s32 0, %v741
    %v743 = vrot.slane %v735, %v742
    %v744 = vmul.f32 %v526, %v739
    %v745 = vmul.f32 %v527, %v739
    %v746 = vmul.f32 %v528, %v739
    %v747 = vmul.f32 %v529, %v739
    %v748 = vmul.f32 %v530, %v743
    %v749 = vmul.f32 %v531, %v743
    %v750 = vmul.f32 %v532, %v743
    %v751 = vmul.f32 %v533, %v743
    %752 = vst [vmem:[%s3] sm:$0xff] %v744
    %753 = vst [vmem:[%s3 + $0x8] sm:$0xff] %v745
    %754 = vst [vmem:[%s3 + $0x10] sm:$0xff] %v746
    %755 = vst [vmem:[%s3 + $0x18] sm:$0xff] %v747
    %756 = vst [vmem:[%s3 + $0x20] sm:$0xff] %v748
    %757 = vst [vmem:[%s3 + $0x28] sm:$0xff] %v749
    %758 = vst [vmem:[%s3 + $0x30] sm:$0xff] %v750
    %759 = vst [vmem:[%s3 + $0x38] sm:$0xff] %v751
    // Predicated region
    $region18: #{cbam_forward.1} parent=1 // pred_check
      _
    $region19: #{cbam_forward.1} parent=1 // pred_check_branch
      %761 = sbr.rel (0) target = $region21
    $region20: #{cbam_forward.1} parent=1 // pred_region
      _
    $region21: #{cbam_forward.1} parent=1 // pred_fallthru
      _
    // Predicated region
    $region22: #{cbam_forward.1} parent=1 // pred_check
      _
    $region23: #{cbam_forward.1} parent=1 // pred_check_branch
      %763 = sbr.rel (0) target = $region25
    $region24: #{cbam_forward.1} parent=1 // pred_region
      _
    $region25: #{cbam_forward.1} parent=1 // pred_fallthru
      _
    %764 = vsyncpa [#allocation3], 1

</llo_original>
